<compile_context>
chip_gen: v5e
topology: v5e:2x2
jax: 0.10.0
libtpu: 0.0.40
codegen_flags: <defaults>
</compile_context>

<pallas_src>
import functools

import jax
import jax.numpy as jnp
from jax.experimental import pallas as pl
from jax.experimental.pallas import tpu as pltpu

EPS = 1e-5         # nn.InstanceNorm1d default eps
NEG_SLOPE = 0.2    # nn.LeakyReLU(0.2)


def _round_up(x, m):
    return ((x + m - 1) // m) * m


def _leaky_relu(x):
    return jnp.where(x >= 0, x, NEG_SLOPE * x)


# ---------------------------------------------------------------------------
# Shared phase logic for the merged kernel:
#   phase 0: accumulate per-channel sum / sum-of-squares into VMEM scratch
#   phase 1: finalize mean / rsqrt(var+eps) once, normalize, LeakyReLU, store
# ---------------------------------------------------------------------------
def _phase_logic(y, o_ref, sum_ref, sq_ref, mean_ref, scale_ref, inv_n):
    phase = pl.program_id(0)
    i = pl.program_id(1)

    @pl.when((phase == 0) & (i == 0))
    def _init():
        sum_ref[...] = jnp.zeros_like(sum_ref)
        sq_ref[...] = jnp.zeros_like(sq_ref)

    @pl.when(phase == 0)
    def _accumulate():
        # Pad rows of y are exactly zero (zero-row gather + zero-padded feats),
        # so no masking is needed here.
        sum_ref[...] += jnp.sum(y, axis=0, keepdims=True)
        sq_ref[...] += jnp.sum(y * y, axis=0, keepdims=True)

    @pl.when((phase == 1) & (i == 0))
    def _finalize():
        mean = sum_ref[...] * inv_n
        # Single-pass variance in f32 (bias term already removed from y, which
        # takes one constant shift out of the cancellation); clamp guards tiny
        # negative residuals.
        var = jnp.maximum(sq_ref[...] * inv_n - mean * mean, 0.0)
        mean_ref[...] = mean
        scale_ref[...] = jax.lax.rsqrt(var + EPS)

    @pl.when(phase == 1)
    def _store():
        z = (y - mean_ref[...]) * scale_ref[...]
        o_ref[...] = _leaky_relu(z)


# ---------------------------------------------------------------------------
# Fused kernel: in-kernel closest-pool gather via one-hot matmul on the
# VMEM-resident pw1 table ( = [fwu; 0] @ W1 ).
# ---------------------------------------------------------------------------
def _fused_kernel(idx_ref, feats_ref, pw1_ref, w2_ref, o_ref,
                  sum_ref, sq_ref, mean_ref, scale_ref, *, inv_n):
    tile = idx_ref.shape[0]
    n1_pad = pw1_ref.shape[0]
    cols = jax.lax.broadcasted_iota(jnp.int32, (tile, n1_pad), 1)
    one_hot = (cols == idx_ref[...]).astype(jnp.float32)          # (tile, n1_pad)
    y = jnp.dot(one_hot, pw1_ref[...], preferred_element_type=jnp.float32)
    y = y + jnp.dot(feats_ref[...], w2_ref[...],
                    preferred_element_type=jnp.float32)
    _phase_logic(y, o_ref, sum_ref, sq_ref, mean_ref, scale_ref, inv_n)


# ---------------------------------------------------------------------------
# Fallback kernel for large N1: the pw1 rows are gathered in XLA and streamed
# in per tile.
# ---------------------------------------------------------------------------
def _pregathered_kernel(py_ref, feats_ref, w2_ref, o_ref,
                        sum_ref, sq_ref, mean_ref, scale_ref, *, inv_n):
    y = py_ref[...] + jnp.dot(feats_ref[...], w2_ref[...],
                              preferred_element_type=jnp.float32)
    _phase_logic(y, o_ref, sum_ref, sq_ref, mean_ref, scale_ref, inv_n)


# ---------------------------------------------------------------------------
# UpSample.forward
# ---------------------------------------------------------------------------
def upsample_forward(params, features_will_upsample, upsample_idx,
                     features_upsampled, tile_n=4096, fuse_gather=None):
    """MLP([d_in, d_out])(cat([closest_pool(f_wu, idx), f_up], dim=1))."""
    fwu = features_will_upsample
    fup = features_upsampled
    n1, d1 = fwu.shape
    n2, d2 = fup.shape
    w = params["w"]                       # [d1 + d2, d_out] (Conv1d weight.T)
    d_out = w.shape[1]
    w1, w2 = w[:d1], w[d1:]
    # Conv1d bias shifts every point of a channel equally and InstanceNorm1d
    # (affine=False) subtracts the per-channel mean, so the bias cancels exactly
    # and is dropped (also removes a constant from the variance cancellation).

    # Fold closest_pool through the linear layer: pooled @ W1 == pw1[idx[:, 0]]
    # with pw1 = [fwu; 0] @ W1, a tiny [n1 + 1, d_out] lookup table.
    pw1 = jnp.concatenate(
        [jnp.dot(fwu, w1, preferred_element_type=jnp.float32),
         jnp.zeros((1, d_out), jnp.float32)], axis=0)
    idx0 = upsample_idx[:, 0].astype(jnp.int32)

    # Pad N to a tile multiple.  Padded idx rows select the zero row and padded
    # feature rows are zero, so they contribute exactly 0 to the statistics;
    # padded output rows are sliced off at the end.  (n2 / tile are static, so
    # a new point count recompiles -- acceptable per review.)
    tile = min(_round_up(max(tile_n, 8), 8), _round_up(n2, 8))
    n_pad = _round_up(n2, tile)
    pad = n_pad - n2
    feats = jnp.pad(fup, ((0, pad), (0, 0))) if pad else fup
    inv_n = 1.0 / float(max(n2, 1))

    n1_pad = _round_up(n1 + 1, 128)
    if fuse_gather is None:
        # One-hot gather only while the pw1 table / per-tile one-hot stay small.
        fuse_gather = n1_pad <= 256

    tile_map = lambda p, i: (i, 0)
    const_map = lambda p, i: (0, 0)

    if fuse_gather:
        pw1_pad = jnp.pad(pw1, ((0, n1_pad - (n1 + 1)), (0, 0)))
        idx_pad = (jnp.pad(idx0, (0, pad), constant_values=n1) if pad else idx0)
        idx_col = idx_pad.reshape(n_pad, 1)
        kernel = functools.partial(_fused_kernel, inv_n=inv_n)
        operands = (idx_col, feats, pw1_pad, w2)
        in_specs = [
            pl.BlockSpec((tile, 1), tile_map),          # closest-neighbor idx
            pl.BlockSpec((tile, d2), tile_map),         # features_upsampled
            pl.BlockSpec((n1_pad, d_out), const_map),   # pw1 table (resident)
            pl.BlockSpec((d2, d_out), const_map),       # W2
        ]
    else:
        # TODO(synk): large-N1 fallback gathers the pw1 rows in XLA; an in-kernel
        # DMA row gather would avoid this [n2, d_out] HBM materialization.
        py = jnp.take(pw1, idx0, axis=0)
        py = jnp.pad(py, ((0, pad), (0, 0))) if pad else py
        kernel = functools.partial(_pregathered_kernel, inv_n=inv_n)
        operands = (py, feats, w2)
        in_specs = [
            pl.BlockSpec((tile, d_out), tile_map),      # gathered pw1 rows
            pl.BlockSpec((tile, d2), tile_map),         # features_upsampled
            pl.BlockSpec((d2, d_out), const_map),       # W2
        ]

    # Single fused call: leading phase axis (0 = stats, 1 = normalize + store).
    # The output block index is p*i, so the output buffer stays resident (never
    # flushed) during the stats phase and is written tile-by-tile in phase 1.
    grid = (2, n_pad // tile)
    out = pl.pallas_call(
        kernel,
        out_shape=jax.ShapeDtypeStruct((n_pad, d_out), jnp.float32),
        grid=grid,
        in_specs=in_specs,
        out_specs=pl.BlockSpec((tile, d_out), lambda p, i: (p * i, 0)),
        scratch_shapes=[pltpu.VMEM((1, d_out), jnp.float32) for _ in range(4)],
        compiler_params=pltpu.CompilerParams(
            dimension_semantics=("arbitrary", "arbitrary")),
    )(*operands)
    return out[:n2]


def init_params(key, d_in, d_out):
    kw, kb = jax.random.split(key)
    s = 0.1
    return {
        "w": s * jax.random.normal(kw, (d_in, d_out), jnp.float32),
        "b": s * jax.random.normal(kb, (1, d_out), jnp.float32),
    }


def reference_forward(params, fwu, idx, fup):
    """Pure-JAX reference mirroring the PyTorch module (f32, includes bias)."""
    d1 = fwu.shape[1]
    pad = jnp.concatenate([fwu, jnp.zeros((1, d1), fwu.dtype)], axis=0)
    pooled = jnp.take(pad, idx[:, 0], axis=0)
    x = jnp.concatenate([pooled, fup], axis=1)
    y = jnp.dot(x, params["w"], preferred_element_type=jnp.float32) + params["b"]
    mean = jnp.mean(y, axis=0, keepdims=True)
    var = jnp.mean(jnp.square(y - mean), axis=0, keepdims=True)
    y = (y - mean) * jax.lax.rsqrt(var + EPS)
    return _leaky_relu(y)


if __name__ == "__main__":
    N1, N2 = 64, 150          # points before / after upsampling (N2 % tile != 0)
    D1, D2 = 16, 16           # feature widths; d_in = D1 + D2
    D_OUT = 32
    MAX_NUM = 8               # neighbor-list width; only column 0 is used

    key = jax.random.PRNGKey(0)
    k1, k2, k3, k4 = jax.random.split(key, 4)
    features_will_upsample = jax.random.normal(k1, (N1, D1), jnp.float32)
    features_upsampled = jax.random.normal(k2, (N2, D2), jnp.float32)
    # indices in [0, N1]; index N1 selects the zero-padding row (as in torch)
    upsample_idx = jax.random.randint(k3, (N2, MAX_NUM), 0, N1 + 1, jnp.int32)
    params = init_params(k4, D1 + D2, D_OUT)

    ref = reference_forward(params, features_will_upsample, upsample_idx,
                            features_upsampled)

    # 1) small tile: exercises multi-tile grid + padded tail (fused gather)
    out = upsample_forward(params, features_will_upsample, upsample_idx,
                           features_upsampled, tile_n=64)
    out = jax.block_until_ready(out)
    assert out.shape == (N2, D_OUT)
    err = float(jnp.max(jnp.abs(out - ref)))
    assert jnp.allclose(out, ref, atol=2e-2, rtol=2e-2), err

    # 2) default (large) tile: single-tile-per-phase path
    out2 = jax.block_until_ready(
        upsample_forward(params, features_will_upsample, upsample_idx,
                         features_upsampled))
    assert jnp.allclose(out2, ref, atol=2e-2, rtol=2e-2)

    # 3) XLA-gather fallback path (large-N1 configurations)
    out3 = jax.block_until_ready(
        upsample_forward(params, features_will_upsample, upsample_idx,
                         features_upsampled, tile_n=64, fuse_gather=False))
    assert jnp.allclose(out3, ref, atol=2e-2, rtol=2e-2)

    print("KERNEL_OK")
</pallas_src>

<mosaic_0001>
module attributes {stable_mosaic.version = 11 : i64} {
  func.func @_fused_kernel(%arg0: i32, %arg1: i32, %arg2: memref<64x1xi32, #tpu.memory_space<vmem>>, %arg3: memref<64x16xf32, #tpu.memory_space<vmem>>, %arg4: memref<128x32xf32, #tpu.memory_space<vmem>>, %arg5: memref<16x32xf32, #tpu.memory_space<vmem>>, %arg6: memref<64x32xf32, #tpu.memory_space<vmem>>, %arg7: memref<1x32xf32, #tpu.memory_space<vmem>>, %arg8: memref<1x32xf32, #tpu.memory_space<vmem>>, %arg9: memref<1x32xf32, #tpu.memory_space<vmem>>, %arg10: memref<1x32xf32, #tpu.memory_space<vmem>>) attributes {dimension_semantics = [#tpu.dimension_semantics<arbitrary>, #tpu.dimension_semantics<arbitrary>], iteration_bounds = array<i64: 2, 3>, scalar_prefetch = 0 : i64, scratch_operands = 4 : i64, tpu.core_type = #tpu.core_type<tc>, window_params = [{transform_indices = @transform_0, window_bounds = array<i64: 64, 1>}, {transform_indices = @transform_1, window_bounds = array<i64: 64, 16>}, {pipeline_mode = #tpu.pipeline_mode<synchronous>, transform_indices = @transform_2, window_bounds = array<i64: 128, 32>}, {pipeline_mode = #tpu.pipeline_mode<synchronous>, transform_indices = @transform_3, window_bounds = array<i64: 16, 32>}, {transform_indices = @transform_4, window_bounds = array<i64: 64, 32>}]} {
    %0 = tpu.iota {dimensions = array<i32: 1>} : vector<64x128xi32>
    %c0 = arith.constant 0 : index
    %c0_0 = arith.constant 0 : index
    %1 = vector.load %arg2[%c0, %c0_0] : memref<64x1xi32, #tpu.memory_space<vmem>>, vector<64x1xi32>
    %2 = vector.broadcast %1 : vector<64x1xi32> to vector<64x128xi32>
    %3 = arith.cmpi eq, %0, %2 : vector<64x128xi32>
    %4 = arith.extui %3 : vector<64x128xi1> to vector<64x128xi32>
    %5 = arith.sitofp %4 : vector<64x128xi32> to vector<64x128xf32>
    %c0_1 = arith.constant 0 : index
    %c0_2 = arith.constant 0 : index
    %6 = vector.load %arg4[%c0_1, %c0_2] : memref<128x32xf32, #tpu.memory_space<vmem>>, vector<128x32xf32>
    %cst = arith.constant dense<0.000000e+00> : vector<64x32xf32>
    %7 = tpu.matmul %5, %6, %cst {dimension_numbers = #tpu.dot_dimension_numbers<[1], [0], [0], [1], [0, 0, 1, 1], [], []>} : vector<64x128xf32>, vector<128x32xf32>, vector<64x32xf32> -> vector<64x32xf32>
    %c0_3 = arith.constant 0 : index
    %c0_4 = arith.constant 0 : index
    %8 = vector.load %arg3[%c0_3, %c0_4] : memref<64x16xf32, #tpu.memory_space<vmem>>, vector<64x16xf32>
    %c0_5 = arith.constant 0 : index
    %c0_6 = arith.constant 0 : index
    %9 = vector.load %arg5[%c0_5, %c0_6] : memref<16x32xf32, #tpu.memory_space<vmem>>, vector<16x32xf32>
    %cst_7 = arith.constant dense<0.000000e+00> : vector<64x32xf32>
    %10 = tpu.matmul %8, %9, %cst_7 {dimension_numbers = #tpu.dot_dimension_numbers<[1], [0], [0], [1], [0, 0, 1, 1], [], []>} : vector<64x16xf32>, vector<16x32xf32>, vector<64x32xf32> -> vector<64x32xf32>
    %11 = arith.addf %7, %10 : vector<64x32xf32>
    %c0_i32 = arith.constant 0 : i32
    %12 = arith.cmpi eq, %arg0, %c0_i32 : i32
    %c0_i32_8 = arith.constant 0 : i32
    %13 = arith.cmpi eq, %arg1, %c0_i32_8 : i32
    %14 = arith.andi %12, %13 : i1
    %15 = arith.extui %14 : i1 to i32
    %c0_i32_9 = arith.constant 0 : i32
    %16 = arith.cmpi ne, %15, %c0_i32_9 : i32
    scf.if %16 {
      %cst_16 = arith.constant 0.000000e+00 : f32
      %28 = vector.broadcast %cst_16 : f32 to vector<1x32xf32>
      %c0_17 = arith.constant 0 : index
      %c0_18 = arith.constant 0 : index
      %29 = vector.load %arg7[%c0_17, %c0_18] : memref<1x32xf32, #tpu.memory_space<vmem>>, vector<1x32xf32>
      tpu.vector_store %arg7[%c0_17, %c0_18], %28 {strides = array<i32>} : memref<1x32xf32, #tpu.memory_space<vmem>>, vector<1x32xf32>,
      %cst_19 = arith.constant 0.000000e+00 : f32
      %30 = vector.broadcast %cst_19 : f32 to vector<1x32xf32>
      %c0_20 = arith.constant 0 : index
      %c0_21 = arith.constant 0 : index
      %31 = vector.load %arg8[%c0_20, %c0_21] : memref<1x32xf32, #tpu.memory_space<vmem>>, vector<1x32xf32>
      tpu.vector_store %arg8[%c0_20, %c0_21], %30 {strides = array<i32>} : memref<1x32xf32, #tpu.memory_space<vmem>>, vector<1x32xf32>,
    } else {
    }
    %c0_i32_10 = arith.constant 0 : i32
    %17 = arith.cmpi eq, %arg0, %c0_i32_10 : i32
    %18 = arith.extui %17 : i1 to i32
    %c0_i32_11 = arith.constant 0 : i32
    %19 = arith.cmpi ne, %18, %c0_i32_11 : i32
    scf.if %19 {
      %c0_16 = arith.constant 0 : index
      %c0_17 = arith.constant 0 : index
      %28 = vector.load %arg7[%c0_16, %c0_17] : memref<1x32xf32, #tpu.memory_space<vmem>>, vector<1x32xf32>
      %cst_18 = arith.constant dense<0.000000e+00> : vector<32xf32>
      %29 = vector.multi_reduction <add>, %11, %cst_18 [0] : vector<64x32xf32> to vector<32xf32>
      %30 = vector.shape_cast %29 : vector<32xf32> to vector<1x32xf32>
      %31 = arith.addf %28, %30 : vector<1x32xf32>
      %c0_19 = arith.constant 0 : index
      %c0_20 = arith.constant 0 : index
      %32 = vector.load %arg7[%c0_19, %c0_20] : memref<1x32xf32, #tpu.memory_space<vmem>>, vector<1x32xf32>
      tpu.vector_store %arg7[%c0_19, %c0_20], %31 {strides = array<i32>} : memref<1x32xf32, #tpu.memory_space<vmem>>, vector<1x32xf32>,
      %c0_21 = arith.constant 0 : index
      %c0_22 = arith.constant 0 : index
      %33 = vector.load %arg8[%c0_21, %c0_22] : memref<1x32xf32, #tpu.memory_space<vmem>>, vector<1x32xf32>
      %34 = arith.mulf %11, %11 : vector<64x32xf32>
      %cst_23 = arith.constant dense<0.000000e+00> : vector<32xf32>
      %35 = vector.multi_reduction <add>, %34, %cst_23 [0] : vector<64x32xf32> to vector<32xf32>
      %36 = vector.shape_cast %35 : vector<32xf32> to vector<1x32xf32>
      %37 = arith.addf %33, %36 : vector<1x32xf32>
      %c0_24 = arith.constant 0 : index
      %c0_25 = arith.constant 0 : index
      %38 = vector.load %arg8[%c0_24, %c0_25] : memref<1x32xf32, #tpu.memory_space<vmem>>, vector<1x32xf32>
      tpu.vector_store %arg8[%c0_24, %c0_25], %37 {strides = array<i32>} : memref<1x32xf32, #tpu.memory_space<vmem>>, vector<1x32xf32>,
    } else {
    }
    %c1_i32 = arith.constant 1 : i32
    %20 = arith.cmpi eq, %arg0, %c1_i32 : i32
    %c0_i32_12 = arith.constant 0 : i32
    %21 = arith.cmpi eq, %arg1, %c0_i32_12 : i32
    %22 = arith.andi %20, %21 : i1
    %23 = arith.extui %22 : i1 to i32
    %c0_i32_13 = arith.constant 0 : i32
    %24 = arith.cmpi ne, %23, %c0_i32_13 : i32
    scf.if %24 {
      %c0_16 = arith.constant 0 : index
      %c0_17 = arith.constant 0 : index
      %28 = vector.load %arg7[%c0_16, %c0_17] : memref<1x32xf32, #tpu.memory_space<vmem>>, vector<1x32xf32>
      %cst_18 = arith.constant 0.00666666683 : f32
      %29 = vector.broadcast %cst_18 : f32 to vector<1x32xf32>
      %30 = arith.mulf %28, %29 : vector<1x32xf32>
      %c0_19 = arith.constant 0 : index
      %c0_20 = arith.constant 0 : index
      %31 = vector.load %arg8[%c0_19, %c0_20] : memref<1x32xf32, #tpu.memory_space<vmem>>, vector<1x32xf32>
      %cst_21 = arith.constant 0.00666666683 : f32
      %32 = vector.broadcast %cst_21 : f32 to vector<1x32xf32>
      %33 = arith.mulf %31, %32 : vector<1x32xf32>
      %34 = arith.mulf %30, %30 : vector<1x32xf32>
      %35 = arith.subf %33, %34 : vector<1x32xf32>
      %cst_22 = arith.constant 0.000000e+00 : f32
      %36 = vector.broadcast %cst_22 : f32 to vector<1x32xf32>
      %37 = arith.maximumf %35, %36 : vector<1x32xf32>
      %c0_23 = arith.constant 0 : index
      %c0_24 = arith.constant 0 : index
      %38 = vector.load %arg9[%c0_23, %c0_24] : memref<1x32xf32, #tpu.memory_space<vmem>>, vector<1x32xf32>
      tpu.vector_store %arg9[%c0_23, %c0_24], %30 {strides = array<i32>} : memref<1x32xf32, #tpu.memory_space<vmem>>, vector<1x32xf32>,
      %cst_25 = arith.constant 9.99999974E-6 : f32
      %39 = vector.broadcast %cst_25 : f32 to vector<1x32xf32>
      %40 = arith.addf %37, %39 : vector<1x32xf32>
      %41 = math.rsqrt %40 : vector<1x32xf32>
      %c0_26 = arith.constant 0 : index
      %c0_27 = arith.constant 0 : index
      %42 = vector.load %arg10[%c0_26, %c0_27] : memref<1x32xf32, #tpu.memory_space<vmem>>, vector<1x32xf32>
      tpu.vector_store %arg10[%c0_26, %c0_27], %41 {strides = array<i32>} : memref<1x32xf32, #tpu.memory_space<vmem>>, vector<1x32xf32>,
    } else {
    }
    %c1_i32_14 = arith.constant 1 : i32
    %25 = arith.cmpi eq, %arg0, %c1_i32_14 : i32
    %26 = arith.extui %25 : i1 to i32
    %c0_i32_15 = arith.constant 0 : i32
    %27 = arith.cmpi ne, %26, %c0_i32_15 : i32
    scf.if %27 {
      %c0_16 = arith.constant 0 : index
      %c0_17 = arith.constant 0 : index
      %28 = vector.load %arg9[%c0_16, %c0_17] : memref<1x32xf32, #tpu.memory_space<vmem>>, vector<1x32xf32>
      %29 = vector.broadcast %28 : vector<1x32xf32> to vector<64x32xf32>
      %30 = arith.subf %11, %29 : vector<64x32xf32>
      %c0_18 = arith.constant 0 : index
      %c0_19 = arith.constant 0 : index
      %31 = vector.load %arg10[%c0_18, %c0_19] : memref<1x32xf32, #tpu.memory_space<vmem>>, vector<1x32xf32>
      %32 = vector.broadcast %31 : vector<1x32xf32> to vector<64x32xf32>
      %33 = arith.mulf %30, %32 : vector<64x32xf32>
      %cst_20 = arith.constant 0.000000e+00 : f32
      %34 = vector.broadcast %cst_20 : f32 to vector<64x32xf32>
      %35 = arith.cmpf oge, %33, %34 : vector<64x32xf32>
      %cst_21 = arith.constant 2.000000e-01 : f32
      %36 = vector.broadcast %cst_21 : f32 to vector<64x32xf32>
      %37 = arith.mulf %36, %33 : vector<64x32xf32>
      %38 = arith.select %35, %33, %37 : vector<64x32xi1>, vector<64x32xf32>
      %c0_22 = arith.constant 0 : index
      %c0_23 = arith.constant 0 : index
      %39 = vector.load %arg6[%c0_22, %c0_23] : memref<64x32xf32, #tpu.memory_space<vmem>>, vector<64x32xf32>
      tpu.vector_store %arg6[%c0_22, %c0_23], %38 {strides = array<i32>} : memref<64x32xf32, #tpu.memory_space<vmem>>, vector<64x32xf32>,
    } else {
    }
    return
  }
  func.func @transform_0(%arg0: i32, %arg1: i32) -> (i32, i32) {
    %c0_i32 = arith.constant 0 : i32
    %c0_i32_0 = arith.constant 0 : i32
    return %arg1, %c0_i32 : i32, i32
  }
  func.func @transform_1(%arg0: i32, %arg1: i32) -> (i32, i32) {
    %c0_i32 = arith.constant 0 : i32
    %c0_i32_0 = arith.constant 0 : i32
    return %arg1, %c0_i32 : i32, i32
  }
  func.func @transform_2(%arg0: i32, %arg1: i32) -> (i32, i32) {
    %c0_i32 = arith.constant 0 : i32
    %c0_i32_0 = arith.constant 0 : i32
    %c0_i32_1 = arith.constant 0 : i32
    return %c0_i32, %c0_i32_0 : i32, i32
  }
  func.func @transform_3(%arg0: i32, %arg1: i32) -> (i32, i32) {
    %c0_i32 = arith.constant 0 : i32
    %c0_i32_0 = arith.constant 0 : i32
    %c0_i32_1 = arith.constant 0 : i32
    return %c0_i32, %c0_i32_0 : i32, i32
  }
  func.func @transform_4(%arg0: i32, %arg1: i32) -> (i32, i32) {
    %0 = arith.muli %arg0, %arg1 : i32
    %c0_i32 = arith.constant 0 : i32
    %c0_i32_0 = arith.constant 0 : i32
    return %0, %c0_i32 : i32, i32
  }
}

</mosaic_0001>

<llo_original>
// kernel: tpu_custom_call.1
$region0: #{tpu_custom_call.1}
  #allocation0 [shape = 'u32[]', space=smem, size = 0x4, offset = 0x4, fixed_abs, tag = 'smem constant byte address 0x4 - core index']
  #allocation1 [shape = 'u32[72,128]{1,0:T(1,128)}', space=vmem, size = 0x9000, scoped, tag = 'internal scratch']
  #allocation2 [shape = 'f32[1,32]{1,0:T(1,128)}', space=vmem, size = 0x200, scoped, tag = 'scratch operand']
  #allocation3 [shape = 'f32[1,32]{1,0:T(1,128)}', space=vmem, size = 0x200, scoped, tag = 'scratch operand']
  #allocation4 [shape = 'f32[1,32]{1,0:T(1,128)}', space=vmem, size = 0x200, scoped, tag = 'scratch operand']
  #allocation5 [shape = 'f32[1,32]{1,0:T(1,128)}', space=vmem, size = 0x200, scoped, tag = 'scratch operand']
  %s0 = inlined_call_operand.vmem [shape: s32[192,1], index: 0, kind: input, shape index: {}]
  %s1 = inlined_call_operand.vmem [shape: f32[192,16], index: 1, kind: input, shape index: {}]
  %s2 = inlined_call_operand.vmem [shape: f32[128,32], index: 2, kind: input, shape index: {}]
  %s3 = inlined_call_operand.vmem [shape: f32[16,32], index: 3, kind: input, shape index: {}]
  %s4 = inlined_call_operand.vmem [shape: f32[192,32], index: 4, kind: output, shape index: {}]
  %s5 = sld [smem:[#allocation0]]
  $region65: #{tpu_custom_call.1} parent=0
    _
  %s7 = ssub.s32 1, %s5
  %s8 = scalar_select 0, %s7, %s5
  loop: start=0, step=1, limit=8
  $region2: #{tpu_custom_call.1} parent=0 // loop_pre_header
    _
  $region3: #{tpu_custom_call.1} parent=0 // loop_header
    %s10 = sphi 0, %s14
    %p11 = scmp.ge.s32.totalorder %s10, 8
    %s17 = sphi 0, %s29
    %s18 = sphi 0, %s25
    %s19 = sphi 0, %s17
    %s20 = sphi 0, %s18
    %s21 = sphi 0, %s19
    %s22 = sphi 0, %s20
    %s32 = sphi 0, %s34
    %s35 = sphi 0, %s32
    %s36 = sphi 0, %s35
    %s52 = sphi 0, %s36
    %s58 = sphi 0, %s60
    %s61 = sphi 0, %s58
    %s62 = sphi 0, %s61
    %s78 = sphi 0, %s62
    %s82 = sphi 0, %s82
    %s84 = sphi 0, %s82
    %s85 = sphi 0, %s84
    %s99 = sphi 0, %s85
    %s103 = sphi 0, %s103
    %s105 = sphi 0, %s103
    %s106 = sphi 0, %s105
    %s120 = sphi 0, %s106
    %s128 = sphi 0, %s130
    %s131 = sphi 0, %s128
    %s132 = sphi 0, %s131
    %s148 = sphi 0, %s132
  $region4: #{tpu_custom_call.1} parent=0 // loop_header_branch
    %13 = sbr.rel (%p11) target = $region8
  $region5: #{tpu_custom_call.1} parent=0 // loop_body
    %s15 = ssub.s32 %s10, 1
    %s16 = ssub.s32 %s10, 2
    %s23 = sadd.s32 1, %s18
    %p24 = scmp.ge.s32.totalorder %s23, 3
    %s25 = scalar_select %p24, 0, %s23
    %s26 = sadd.s32 1, %s17
    %s27 = scalar_select %p24, %s26, %s17
    %p28 = scmp.ge.s32.totalorder %s27, 2
    %s29 = scalar_select %p28, 0, %s27
    %s30 = ssub.s32 %s18, %s25
    %p31 = scmp.eq.s32.totalorder %s30, 0
    %s33 = sadd.s32 %s32, 1
    %s34 = scalar_select %p31, %s32, %s33
    %p37 = pneg %p31
    %p38 = scmp.eq.s32.totalorder %s10, 5
    %p39 = por %p37, %p38
    %p40 = scmp.ne.s32.totalorder %s32, %s35
    %p41 = scmp.eq.s32.totalorder %s10, 0
    %p42 = por %p40, %p41
    %p43 = scmp.ne.s32.totalorder %s32, %s35
    %p44 = scmp.eq.s32.totalorder %s15, 5
    %p45 = por %p43, %p44
    %p46 = scmp.ne.s32.totalorder %s35, %s36
    %p47 = scmp.eq.s32.totalorder %s15, 0
    %p48 = por %p46, %p47
    %p49 = scmp.ne.s32.totalorder %s35, %s36
    %p50 = scmp.eq.s32.totalorder %s16, 5
    %p51 = por %p49, %p50
    %p53 = scmp.ne.s32.totalorder %s36, %s52
    %p54 = scmp.eq.s32.totalorder %s16, 0
    %p55 = por %p53, %p54
    %s56 = ssub.s32 %s18, %s25
    %p57 = scmp.eq.s32.totalorder %s56, 0
    %s59 = sadd.s32 %s58, 1
    %s60 = scalar_select %p57, %s58, %s59
    %p63 = pneg %p57
    %p64 = scmp.eq.s32.totalorder %s10, 5
    %p65 = por %p63, %p64
    %p66 = scmp.ne.s32.totalorder %s58, %s61
    %p67 = scmp.eq.s32.totalorder %s10, 0
    %p68 = por %p66, %p67
    %p69 = scmp.ne.s32.totalorder %s58, %s61
    %p70 = scmp.eq.s32.totalorder %s15, 5
    %p71 = por %p69, %p70
    %p72 = scmp.ne.s32.totalorder %s61, %s62
    %p73 = scmp.eq.s32.totalorder %s15, 0
    %p74 = por %p72, %p73
    %p75 = scmp.ne.s32.totalorder %s61, %s62
    %p76 = scmp.eq.s32.totalorder %s16, 5
    %p77 = por %p75, %p76
    %p79 = scmp.ne.s32.totalorder %s62, %s78
    %p80 = scmp.eq.s32.totalorder %s16, 0
    %p81 = por %p79, %p80
    %s83 = sadd.s32 %s82, 1
    %p86 = scmp.eq.s32.totalorder %s10, 5
    %p87 = scmp.ne.s32.totalorder %s82, %s84
    %p88 = scmp.eq.s32.totalorder %s10, 0
    %p89 = por %p87, %p88
    %p90 = scmp.ne.s32.totalorder %s82, %s84
    %p91 = scmp.eq.s32.totalorder %s15, 5
    %p92 = por %p90, %p91
    %p93 = scmp.ne.s32.totalorder %s84, %s85
    %p94 = scmp.eq.s32.totalorder %s15, 0
    %p95 = por %p93, %p94
    %p96 = scmp.ne.s32.totalorder %s84, %s85
    %p97 = scmp.eq.s32.totalorder %s16, 5
    %p98 = por %p96, %p97
    %p100 = scmp.ne.s32.totalorder %s85, %s99
    %p101 = scmp.eq.s32.totalorder %s16, 0
    %p102 = por %p100, %p101
    %s104 = sadd.s32 %s103, 1
    %p107 = scmp.eq.s32.totalorder %s10, 5
    %p108 = scmp.ne.s32.totalorder %s103, %s105
    %p109 = scmp.eq.s32.totalorder %s10, 0
    %p110 = por %p108, %p109
    %p111 = scmp.ne.s32.totalorder %s103, %s105
    %p112 = scmp.eq.s32.totalorder %s15, 5
    %p113 = por %p111, %p112
    %p114 = scmp.ne.s32.totalorder %s105, %s106
    %p115 = scmp.eq.s32.totalorder %s15, 0
    %p116 = por %p114, %p115
    %p117 = scmp.ne.s32.totalorder %s105, %s106
    %p118 = scmp.eq.s32.totalorder %s16, 5
    %p119 = por %p117, %p118
    %p121 = scmp.ne.s32.totalorder %s106, %s120
    %p122 = scmp.eq.s32.totalorder %s16, 0
    %p123 = por %p121, %p122
    %s124 = smul.u32 %s17, %s18
    %s125 = smul.u32 %s29, %s25
    %s126 = ssub.s32 %s124, %s125
    %p127 = scmp.eq.s32.totalorder %s126, 0
    %s129 = sadd.s32 %s128, 1
    %s130 = scalar_select %p127, %s128, %s129
    %p133 = pneg %p127
    %p134 = scmp.eq.s32.totalorder %s10, 5
    %p135 = por %p133, %p134
    %p136 = scmp.ne.s32.totalorder %s128, %s131
    %p137 = scmp.eq.s32.totalorder %s10, 0
    %p138 = por %p136, %p137
    %p139 = scmp.ne.s32.totalorder %s128, %s131
    %p140 = scmp.eq.s32.totalorder %s15, 5
    %p141 = por %p139, %p140
    %p142 = scmp.ne.s32.totalorder %s131, %s132
    %p143 = scmp.eq.s32.totalorder %s15, 0
    %p144 = por %p142, %p143
    %p145 = scmp.ne.s32.totalorder %s131, %s132
    %p146 = scmp.eq.s32.totalorder %s16, 5
    %p147 = por %p145, %p146
    %p149 = scmp.ne.s32.totalorder %s132, %s148
    %p150 = scmp.eq.s32.totalorder %s16, 0
    %p151 = por %p149, %p150
    %p152 = scmp.le.s32.totalorder 1, %s10
    %p153 = scmp.lt.s32.totalorder %s10, 7
    %p154 = pnand %p152, %p153
    %p155 = pneg %p154
    // Predicated region
    $region9: #{tpu_custom_call.1} parent=5 // pred_check
      _
    $region10: #{tpu_custom_call.1} parent=5 // pred_check_branch
      %157 = sbr.rel (%p154) target = $region12
    $region11: #{tpu_custom_call.1} parent=5 // pred_region
      %s158 = ssub.s32 %s10, 1
      // Predicated region
      $region13: #{tpu_custom_call.1} parent=11 // pred_check
        %p159 = pneg %p95
      $region14: #{tpu_custom_call.1} parent=11 // pred_check_branch
        %161 = sbr.rel (%p159) target = $region16
      $region15: #{tpu_custom_call.1} parent=11 // pred_region
        _
      $region16: #{tpu_custom_call.1} parent=11 // pred_fallthru
        _
      // Predicated region
      $region17: #{tpu_custom_call.1} parent=11 // pred_check
        %p162 = pneg %p116
      $region18: #{tpu_custom_call.1} parent=11 // pred_check_branch
        %164 = sbr.rel (%p162) target = $region20
      $region19: #{tpu_custom_call.1} parent=11 // pred_region
        _
      $region20: #{tpu_custom_call.1} parent=11 // pred_fallthru
        _
    $region12: #{tpu_custom_call.1} parent=5 // pred_fallthru
      _
    %p165 = scmp.lt.s32.totalorder %s10, 6
    // Predicated region
    $region21: #{tpu_custom_call.1} parent=5 // pred_check
      %p166 = pneg %p165
    $region22: #{tpu_custom_call.1} parent=5 // pred_check_branch
      %168 = sbr.rel (%p166) target = $region24
    $region23: #{tpu_custom_call.1} parent=5 // pred_region
      // Predicated region
      $region25: #{tpu_custom_call.1} parent=23 // pred_check
        %p169 = pneg %p42
      $region26: #{tpu_custom_call.1} parent=23 // pred_check_branch
        %171 = sbr.rel (%p169) target = $region28
      $region27: #{tpu_custom_call.1} parent=23 // pred_region
        %s172 = smul.u32 8, %s18
        %p173 = scmp.lt.s32.totalorder %s172, 23
        %s174 = scalar_select %p173, %s172, 23
        %s175 = smul.addr %s174, 8
        %s176 = scalar_lea.vmem %s0, %s175
        %s177 = smul.u32 8, %s18
      $region28: #{tpu_custom_call.1} parent=23 // pred_fallthru
        _
      // Predicated region
      $region29: #{tpu_custom_call.1} parent=23 // pred_check
        %p178 = pneg %p68
      $region30: #{tpu_custom_call.1} parent=23 // pred_check_branch
        %180 = sbr.rel (%p178) target = $region32
      $region31: #{tpu_custom_call.1} parent=23 // pred_region
        %s181 = smul.u32 8, %s18
        %p182 = scmp.lt.s32.totalorder %s181, 23
        %s183 = scalar_select %p182, %s181, 23
        %s184 = smul.addr %s183, 8
        %s185 = scalar_lea.vmem %s1, %s184
        %s186 = smul.u32 8, %s18
      $region32: #{tpu_custom_call.1} parent=23 // pred_fallthru
        _
    $region24: #{tpu_custom_call.1} parent=5 // pred_fallthru
      _
    %p187 = scmp.le.s32.totalorder 1, %s10
    %p188 = scmp.lt.s32.totalorder %s10, 7
    %p189 = pnand %p187, %p188
    %p190 = pneg %p189
    // Predicated region
    $region33: #{tpu_custom_call.1} parent=5 // pred_check
      _
    $region34: #{tpu_custom_call.1} parent=5 // pred_check_branch
      %192 = sbr.rel (%p189) target = $region36
    $region35: #{tpu_custom_call.1} parent=5 // pred_region
      %s193 = ssub.s32 %s10, 1
      %s194 = smul.u32 8, %s20
      %p195 = scmp.lt.s32.totalorder %s194, 23
      %s196 = scalar_select %p195, %s194, 23
      %s197 = smul.addr %s196, 8
      %s198 = scalar_lea.vmem %s0, %s197
      %p199 = pneg %p48
      %p200 = pneg %p45
      %s201 = smul.u32 8, %s20
      %p202 = scmp.lt.s32.totalorder %s201, 23
      %s203 = scalar_select %p202, %s201, 23
      %s204 = smul.addr %s203, 8
      %s205 = scalar_lea.vmem %s1, %s204
      %p206 = pneg %p74
      %p207 = pneg %p71
      %p208 = pneg %p95
      %p209 = pneg %p92
      %p210 = pneg %p116
      %p211 = pneg %p113
      %p212 = pneg %p144
      %p213 = pneg %p141
      %s214 = smul.u32 %s19, %s20
      %s215 = smul.u32 8, %s214
      %p216 = scmp.lt.s32.totalorder %s215, 23
      %s217 = scalar_select %p216, %s215, 23
      %s218 = smul.addr %s217, 8
      %s219 = scalar_lea.vmem %s4, %s218
      %s220 = smul.u32 8, %s20
      %p221 = scmp.lt.s32.totalorder %s220, 23
      %s222 = scalar_select %p221, %s220, 23
      %s223 = smul.addr %s222, 8
      %s224 = scalar_lea.vmem %s0, %s223
      %s225 = smul.u32 8, %s20
      %s226 = smul.u32 8, %s20
      %p227 = scmp.lt.s32.totalorder %s226, 23
      %s228 = scalar_select %p227, %s226, 23
      %s229 = smul.addr %s228, 8
      %s230 = scalar_lea.vmem %s1, %s229
      %s231 = smul.u32 8, %s20
      %s232 = smul.u32 %s19, %s20
      %s233 = smul.u32 8, %s232
      %p234 = scmp.lt.s32.totalorder %s233, 23
      %s235 = scalar_select %p234, %s233, 23
      %s236 = smul.addr %s235, 8
      %s237 = scalar_lea.vmem %s4, %s236
      %s238 = smul.u32 %s19, %s20
      %s239 = smul.u32 8, %s238
      %v240 = vlaneseq
      %v241 = vand.u32 %v240, 127
      %v242 = vld [vmem:[%s224] sm:$0xff]
      %v243 = vld [vmem:[%s224 + $0x8] sm:$0xff]
      %v244 = vld [vmem:[%s224 + $0x10] sm:$0xff]
      %v245 = vld [vmem:[%s224 + $0x18] sm:$0xff]
      %v246 = vld [vmem:[%s224 + $0x20] sm:$0xff]
      %v247 = vld [vmem:[%s224 + $0x28] sm:$0xff]
      %v248 = vld [vmem:[%s224 + $0x30] sm:$0xff]
      %v249 = vld [vmem:[%s224 + $0x38] sm:$0xff]
      %250 = vset.pattern.permute.xlu0 0
      %251 = vperm.xlu0 %250, %v242
      %v252 = vpop.permute.xlu0 %251
      %253 = vset.pattern.permute.xlu0 0
      %254 = vperm.xlu0 %253, %v243
      %v255 = vpop.permute.xlu0 %254
      %256 = vset.pattern.permute.xlu0 0
      %257 = vperm.xlu0 %256, %v244
      %v258 = vpop.permute.xlu0 %257
      %259 = vset.pattern.permute.xlu0 0
      %260 = vperm.xlu0 %259, %v245
      %v261 = vpop.permute.xlu0 %260
      %262 = vset.pattern.permute.xlu0 0
      %263 = vperm.xlu0 %262, %v246
      %v264 = vpop.permute.xlu0 %263
      %265 = vset.pattern.permute.xlu0 0
      %266 = vperm.xlu0 %265, %v247
      %v267 = vpop.permute.xlu0 %266
      %268 = vset.pattern.permute.xlu0 0
      %269 = vperm.xlu0 %268, %v248
      %v270 = vpop.permute.xlu0 %269
      %271 = vset.pattern.permute.xlu0 0
      %272 = vperm.xlu0 %271, %v249
      %v273 = vpop.permute.xlu0 %272
      %vm274 = vcmp.eq.s32.totalorder %v241, %v252
      %vm275 = vcmp.eq.s32.totalorder %v241, %v255
      %vm276 = vcmp.eq.s32.totalorder %v241, %v258
      %vm277 = vcmp.eq.s32.totalorder %v241, %v261
      %vm278 = vcmp.eq.s32.totalorder %v241, %v264
      %vm279 = vcmp.eq.s32.totalorder %v241, %v267
      %vm280 = vcmp.eq.s32.totalorder %v241, %v270
      %vm281 = vcmp.eq.s32.totalorder %v241, %v273
      %v282 = vsel %vm274, 1, 0
      %v283 = vsel %vm275, 1, 0
      %v284 = vsel %vm276, 1, 0
      %v285 = vsel %vm277, 1, 0
      %v286 = vsel %vm278, 1, 0
      %v287 = vsel %vm279, 1, 0
      %v288 = vsel %vm280, 1, 0
      %v289 = vsel %vm281, 1, 0
      %v290 = vcvt.s32.f32 %v282
      %v291 = vcvt.s32.f32 %v283
      %v292 = vcvt.s32.f32 %v284
      %v293 = vcvt.s32.f32 %v285
      %v294 = vcvt.s32.f32 %v286
      %v295 = vcvt.s32.f32 %v287
      %v296 = vcvt.s32.f32 %v288
      %v297 = vcvt.s32.f32 %v289
      %v298 = vld [vmem:[%s2] sm:$0xff]
      %v299 = vld [vmem:[%s2 + $0x8] sm:$0xff]
      %v300 = vld [vmem:[%s2 + $0x10] sm:$0xff]
      %v301 = vld [vmem:[%s2 + $0x18] sm:$0xff]
      %v302 = vld [vmem:[%s2 + $0x20] sm:$0xff]
      %v303 = vld [vmem:[%s2 + $0x28] sm:$0xff]
      %v304 = vld [vmem:[%s2 + $0x30] sm:$0xff]
      %v305 = vld [vmem:[%s2 + $0x38] sm:$0xff]
      %v306 = vld [vmem:[%s2 + $0x40] sm:$0xff]
      %v307 = vld [vmem:[%s2 + $0x48] sm:$0xff]
      %v308 = vld [vmem:[%s2 + $0x50] sm:$0xff]
      %v309 = vld [vmem:[%s2 + $0x58] sm:$0xff]
      %v310 = vld [vmem:[%s2 + $0x60] sm:$0xff]
      %v311 = vld [vmem:[%s2 + $0x68] sm:$0xff]
      %v312 = vld [vmem:[%s2 + $0x70] sm:$0xff]
      %v313 = vld [vmem:[%s2 + $0x78] sm:$0xff]
      %v314 = vld [vmem:[%s230] sm:$0xff]
      %v315 = vld [vmem:[%s230 + $0x8] sm:$0xff]
      %v316 = vld [vmem:[%s230 + $0x10] sm:$0xff]
      %v317 = vld [vmem:[%s230 + $0x18] sm:$0xff]
      %v318 = vld [vmem:[%s230 + $0x20] sm:$0xff]
      %v319 = vld [vmem:[%s230 + $0x28] sm:$0xff]
      %v320 = vld [vmem:[%s230 + $0x30] sm:$0xff]
      %v321 = vld [vmem:[%s230 + $0x38] sm:$0xff]
      %v322 = vld [vmem:[%s3] sm:$0xff]
      %v323 = vld [vmem:[%s3 + $0x8] sm:$0xff]
      %vm324 = vcmask 130048
      %v326 = vsel %vm324, %v314, 0
      %v329 = vsel %vm324, %v315, 0
      %v332 = vsel %vm324, %v316, 0
      %v335 = vsel %vm324, %v317, 0
      %v338 = vsel %vm324, %v318, 0
      %v341 = vsel %vm324, %v319, 0
      %v344 = vsel %vm324, %v320, 0
      %v347 = vsel %vm324, %v321, 0
      %349 = vmatpush.msra.mxu0 0.0
      %350 = vmatpush.msra.mxu0 0.0
      %351 = vmatpush.msra.mxu0 0.0
      %352 = vmatpush.msra.mxu0 0.0
      %353 = vmatpush.msra.mxu0 0.0
      %354 = vmatpush.msra.mxu0 0.0
      %355 = vmatpush.msra.mxu0 0.0
      %356 = vmatpush.msra.mxu0 0.0
      %357 = vmatpush.msra.mxu0 0.0
      %358 = vmatpush.msra.mxu0 0.0
      %359 = vmatpush.msra.mxu0 0.0
      %360 = vmatpush.msra.mxu0 0.0
      %361 = vmatpush.msra.mxu0 0.0
      %362 = vmatpush.msra.mxu0 0.0
      %363 = vmatpush.msra.mxu0 %v323
      %364 = vmatpush.msra.mxu0 %v322
      %365 = vmatmul.f32.gmra.mxu0 %v326
      %v366 = vpop.f32.mrf.mxu0
      %v367 = vadd.f32 0.0, %v366
      %368 = vmatmul.f32.gmra.mxu0 %v329
      %v369 = vpop.f32.mrf.mxu0
      %v370 = vadd.f32 0.0, %v369
      %371 = vmatmul.f32.gmra.mxu0 %v332
      %v372 = vpop.f32.mrf.mxu0
      %v373 = vadd.f32 0.0, %v372
      %374 = vmatmul.f32.gmra.mxu0 %v335
      %v375 = vpop.f32.mrf.mxu0
      %v376 = vadd.f32 0.0, %v375
      %377 = vmatmul.f32.gmra.mxu0 %v338
      %v378 = vpop.f32.mrf.mxu0
      %v379 = vadd.f32 0.0, %v378
      %380 = vmatmul.f32.gmra.mxu0 %v341
      %v381 = vpop.f32.mrf.mxu0
      %v382 = vadd.f32 0.0, %v381
      %383 = vmatmul.f32.gmra.mxu0 %v344
      %v384 = vpop.f32.mrf.mxu0
      %v385 = vadd.f32 0.0, %v384
      %386 = vmatmul.f32.gmra.mxu0 %v347
      %v387 = vpop.f32.mrf.mxu0
      %v388 = vadd.f32 0.0, %v387
      %389 = vdwg.mxu0
      %390 = vmatpush.msra.mxu0 %v313
      %391 = vmatpush.msra.mxu0 %v312
      %392 = vmatpush.msra.mxu0 %v311
      %393 = vmatpush.msra.mxu0 %v310
      %394 = vmatpush.msra.mxu0 %v309
      %395 = vmatpush.msra.mxu0 %v308
      %396 = vmatpush.msra.mxu0 %v307
      %397 = vmatpush.msra.mxu0 %v306
      %398 = vmatpush.msra.mxu0 %v305
      %399 = vmatpush.msra.mxu0 %v304
      %400 = vmatpush.msra.mxu0 %v303
      %401 = vmatpush.msra.mxu0 %v302
      %402 = vmatpush.msra.mxu0 %v301
      %403 = vmatpush.msra.mxu0 %v300
      %404 = vmatpush.msra.mxu0 %v299
      %405 = vmatpush.msra.mxu0 %v298
      %406 = vmatmul.f32.gmra.mxu0 %v290
      %v407 = vpop.f32.mrf.mxu0
      %v408 = vadd.f32 %v367, %v407
      %409 = vmatmul.f32.gmra.mxu0 %v291
      %v410 = vpop.f32.mrf.mxu0
      %v411 = vadd.f32 %v370, %v410
      %412 = vmatmul.f32.gmra.mxu0 %v292
      %v413 = vpop.f32.mrf.mxu0
      %v414 = vadd.f32 %v373, %v413
      %415 = vmatmul.f32.gmra.mxu0 %v293
      %v416 = vpop.f32.mrf.mxu0
      %v417 = vadd.f32 %v376, %v416
      %418 = vmatmul.f32.gmra.mxu0 %v294
      %v419 = vpop.f32.mrf.mxu0
      %v420 = vadd.f32 %v379, %v419
      %421 = vmatmul.f32.gmra.mxu0 %v295
      %v422 = vpop.f32.mrf.mxu0
      %v423 = vadd.f32 %v382, %v422
      %424 = vmatmul.f32.gmra.mxu0 %v296
      %v425 = vpop.f32.mrf.mxu0
      %v426 = vadd.f32 %v385, %v425
      %427 = vmatmul.f32.gmra.mxu0 %v297
      %v428 = vpop.f32.mrf.mxu0
      %v429 = vadd.f32 %v388, %v428
      %430 = vdwg.mxu0
      %p431 = scmp.eq.s32.totalorder %s19, 0
      %p432 = scmp.eq.s32.totalorder %s20, 0
      %p433 = pnand %p431, %p432
      %p434 = pneg %p433
      // Predicated region
      $region37: #{tpu_custom_call.1} parent=35 // pred_check
        _
      $region38: #{tpu_custom_call.1} parent=35 // pred_check_branch
        %436 = sbr.rel (%p433) target = $region40
      $region39: #{tpu_custom_call.1} parent=35 // pred_region
        %vm437 = vcmask 253952
        %438 = vst.msk [vmem:[#allocation2] sm:$0x1] %vm437, 0.0
        %439 = vst.msk [vmem:[#allocation3] sm:$0x1] %vm437, 0.0
      $region40: #{tpu_custom_call.1} parent=35 // pred_fallthru
        _
      // Predicated region
      $region41: #{tpu_custom_call.1} parent=35 // pred_check
        %p440 = pneg %p431
      $region42: #{tpu_custom_call.1} parent=35 // pred_check_branch
        %442 = sbr.rel (%p440) target = $region44
      $region43: #{tpu_custom_call.1} parent=35 // pred_region
        %v443 = vld [vmem:[#allocation2] sm:$0x1]
        %vm444 = vcmask 261120
        %v445 = vsel %vm444, %v408, 0.0
        %v446 = vsel %vm444, %v411, 0.0
        %v447 = vadd.f32 %v445, %v446
        %v448 = vsel %vm444, %v414, 0.0
        %v449 = vadd.f32 %v447, %v448
        %v450 = vsel %vm444, %v417, 0.0
        %v451 = vadd.f32 %v449, %v450
        %v452 = vsel %vm444, %v420, 0.0
        %v453 = vadd.f32 %v451, %v452
        %v454 = vsel %vm444, %v423, 0.0
        %v455 = vadd.f32 %v453, %v454
        %v456 = vsel %vm444, %v426, 0.0
        %v457 = vadd.f32 %v455, %v456
        %v458 = vsel %vm444, %v429, 0.0
        %v459 = vadd.f32 %v457, %v458
        %v460 = vrot.slane %v459, 4
        %v461 = vadd.f32 %v459, %v460
        %v462 = vrot.slane %v461, 2
        %v463 = vadd.f32 %v461, %v462
        %v464 = vrot.slane %v463, 1
        %v465 = vadd.f32 %v463, %v464
        %v466 = vadd.f32 %v443, %v465
        %vm467 = vcmask 253952
        %468 = vst.msk [vmem:[#allocation2] sm:$0x1] %vm467, %v466
        %v469 = vld [vmem:[#allocation3] sm:$0x1]
        %v470 = vmul.f32 %v408, %v408
        %v471 = vmul.f32 %v411, %v411
        %v472 = vmul.f32 %v414, %v414
        %v473 = vmul.f32 %v417, %v417
        %v474 = vmul.f32 %v420, %v420
        %v475 = vmul.f32 %v423, %v423
        %v476 = vmul.f32 %v426, %v426
        %v477 = vmul.f32 %v429, %v429
        %v478 = vsel %vm444, %v470, 0.0
        %v479 = vsel %vm444, %v471, 0.0
        %v480 = vadd.f32 %v478, %v479
        %v481 = vsel %vm444, %v472, 0.0
        %v482 = vadd.f32 %v480, %v481
        %v483 = vsel %vm444, %v473, 0.0
        %v484 = vadd.f32 %v482, %v483
        %v485 = vsel %vm444, %v474, 0.0
        %v486 = vadd.f32 %v484, %v485
        %v487 = vsel %vm444, %v475, 0.0
        %v488 = vadd.f32 %v486, %v487
        %v489 = vsel %vm444, %v476, 0.0
        %v490 = vadd.f32 %v488, %v489
        %v491 = vsel %vm444, %v477, 0.0
        %v492 = vadd.f32 %v490, %v491
        %v493 = vrot.slane %v492, 4
        %v494 = vadd.f32 %v492, %v493
        %v495 = vrot.slane %v494, 2
        %v496 = vadd.f32 %v494, %v495
        %v497 = vrot.slane %v496, 1
        %v498 = vadd.f32 %v496, %v497
        %v499 = vadd.f32 %v469, %v498
        %500 = vst.msk [vmem:[#allocation3] sm:$0x1] %vm467, %v499
      $region44: #{tpu_custom_call.1} parent=35 // pred_fallthru
        _
      %p501 = scmp.eq.s32.totalorder %s19, 1
      %p502 = pnand %p501, %p432
      %p503 = pneg %p502
      // Predicated region
      $region45: #{tpu_custom_call.1} parent=35 // pred_check
        _
      $region46: #{tpu_custom_call.1} parent=35 // pred_check_branch
        %505 = sbr.rel (%p502) target = $region48
      $region47: #{tpu_custom_call.1} parent=35 // pred_region
        %v506 = vld [vmem:[#allocation2] sm:$0x1]
        %v507 = vmul.f32 %v506, 0.006666667
        %v508 = vld [vmem:[#allocation3] sm:$0x1]
        %v509 = vmul.f32 %v508, 0.006666667
        %v510 = vmul.f32 %v507, %v507
        %v511 = vsub.f32 %v509, %v510
        %v512 = vmax.f32 %v511, 0.0
        %vm513 = vcmask 253952
        %514 = vst.msk [vmem:[#allocation4] sm:$0x1] %vm513, %v507
        %v515 = vadd.f32 %v512, 1e-05
        %v516 = vrsqrt.pop %v515
        %v517 = vmul.f32 %v516, %v515
        %v518 = vmul.f32 %v517, %v516
        %v519 = vmul.f32 0.5, %v518
        %v520 = vsub.f32 1.5, %v519
        %v521 = vmul.f32 %v516, %v520
        %vm522 = vweird.f32 %v515
        %vm523 = vweird.f32 %v516
        %vm524 = vmor %vm522, %vm523
        %v525 = vsel %vm524, %v516, %v521
        %526 = vst.msk [vmem:[#allocation5] sm:$0x1] %vm513, %v525
      $region48: #{tpu_custom_call.1} parent=35 // pred_fallthru
        _
      // Predicated region
      $region49: #{tpu_custom_call.1} parent=35 // pred_check
        %p527 = pneg %p501
      $region50: #{tpu_custom_call.1} parent=35 // pred_check_branch
        %529 = sbr.rel (%p527) target = $region52
      $region51: #{tpu_custom_call.1} parent=35 // pred_region
        %v530 = vld [vmem:[#allocation4] sm:$0x1]
        %v532 = vperm.slane %v530, 0
        %v534 = vsub.f32 %v408, %v532
        %v535 = vsub.f32 %v411, %v532
        %v536 = vsub.f32 %v414, %v532
        %v537 = vsub.f32 %v417, %v532
        %v538 = vsub.f32 %v420, %v532
        %v539 = vsub.f32 %v423, %v532
        %v540 = vsub.f32 %v426, %v532
        %v541 = vsub.f32 %v429, %v532
        %v542 = vld [vmem:[#allocation5] sm:$0x1]
        %v544 = vperm.slane %v542, 0
        %v546 = vmul.f32 %v534, %v544
        %v547 = vmul.f32 %v535, %v544
        %v548 = vmul.f32 %v536, %v544
        %v549 = vmul.f32 %v537, %v544
        %v550 = vmul.f32 %v538, %v544
        %v551 = vmul.f32 %v539, %v544
        %v552 = vmul.f32 %v540, %v544
        %v553 = vmul.f32 %v541, %v544
        %vm554 = vcmp.ge.f32.partialorder %v546, 0.0
        %vm555 = vcmp.ge.f32.partialorder %v547, 0.0
        %vm556 = vcmp.ge.f32.partialorder %v548, 0.0
        %vm557 = vcmp.ge.f32.partialorder %v549, 0.0
        %vm558 = vcmp.ge.f32.partialorder %v550, 0.0
        %vm559 = vcmp.ge.f32.partialorder %v551, 0.0
        %vm560 = vcmp.ge.f32.partialorder %v552, 0.0
        %vm561 = vcmp.ge.f32.partialorder %v553, 0.0
        %v562 = vmul.f32 %v546, 0.2
        %v563 = vmul.f32 %v547, 0.2
        %v564 = vmul.f32 %v548, 0.2
        %v565 = vmul.f32 %v549, 0.2
        %v566 = vmul.f32 %v550, 0.2
        %v567 = vmul.f32 %v551, 0.2
        %v568 = vmul.f32 %v552, 0.2
        %v569 = vmul.f32 %v553, 0.2
        %v570 = vsel %vm554, %v546, %v562
        %v571 = vsel %vm555, %v547, %v563
        %v572 = vsel %vm556, %v548, %v564
        %v573 = vsel %vm557, %v549, %v565
        %v574 = vsel %vm558, %v550, %v566
        %v575 = vsel %vm559, %v551, %v567
        %v576 = vsel %vm560, %v552, %v568
        %v577 = vsel %vm561, %v553, %v569
        %vm578 = vcmask 261120
        %579 = vst.msk [vmem:[%s237] sm:$0xff] %vm578, %v570
        %580 = vst.msk [vmem:[%s237 + $0x8] sm:$0xff] %vm578, %v571
        %581 = vst.msk [vmem:[%s237 + $0x10] sm:$0xff] %vm578, %v572
        %582 = vst.msk [vmem:[%s237 + $0x18] sm:$0xff] %vm578, %v573
        %583 = vst.msk [vmem:[%s237 + $0x20] sm:$0xff] %vm578, %v574
        %584 = vst.msk [vmem:[%s237 + $0x28] sm:$0xff] %vm578, %v575
        %585 = vst.msk [vmem:[%s237 + $0x30] sm:$0xff] %vm578, %v576
        %586 = vst.msk [vmem:[%s237 + $0x38] sm:$0xff] %vm578, %v577
      $region52: #{tpu_custom_call.1} parent=35 // pred_fallthru
        _
      %s587 = smul.u32 %s19, %s20
      %s588 = smul.u32 8, %s587
      %p589 = scmp.lt.s32.totalorder %s588, 23
      %s590 = scalar_select %p589, %s588, 23
      %s591 = smul.addr %s590, 8
      %s592 = scalar_lea.vmem %s4, %s591
      // Predicated region
      $region53: #{tpu_custom_call.1} parent=35 // pred_check
        %p593 = pneg %p141
      $region54: #{tpu_custom_call.1} parent=35 // pred_check_branch
        %595 = sbr.rel (%p593) target = $region56
      $region55: #{tpu_custom_call.1} parent=35 // pred_region
        %s596 = smul.u32 %s19, %s20
        %s597 = smul.u32 8, %s596
      $region56: #{tpu_custom_call.1} parent=35 // pred_fallthru
        _
    $region36: #{tpu_custom_call.1} parent=5 // pred_fallthru
      _
    %p598 = scmp.le.s32.totalorder 2, %s10
    // Predicated region
    $region57: #{tpu_custom_call.1} parent=5 // pred_check
      %p599 = pneg %p598
    $region58: #{tpu_custom_call.1} parent=5 // pred_check_branch
      %601 = sbr.rel (%p599) target = $region60
    $region59: #{tpu_custom_call.1} parent=5 // pred_region
      %s602 = ssub.s32 %s10, 2
      // Predicated region
      $region61: #{tpu_custom_call.1} parent=59 // pred_check
        %p603 = pneg %p147
      $region62: #{tpu_custom_call.1} parent=59 // pred_check_branch
        %605 = sbr.rel (%p603) target = $region64
      $region63: #{tpu_custom_call.1} parent=59 // pred_region
        %s606 = smul.u32 %s21, %s22
        %s607 = smul.u32 8, %s606
        %p608 = scmp.lt.s32.totalorder %s607, 23
        %s609 = scalar_select %p608, %s607, 23
        %s610 = smul.addr %s609, 8
        %s611 = scalar_lea.vmem %s4, %s610
      $region64: #{tpu_custom_call.1} parent=59 // pred_fallthru
        _
    $region60: #{tpu_custom_call.1} parent=5 // pred_fallthru
      _
  $region6: #{tpu_custom_call.1} parent=0 // loop_footer
    %s14 = sadd.s32 1, %s10
  $region7: #{tpu_custom_call.1} parent=0 // loop_footer_branch
    %9 = sbr.rel target = $region3
  $region8: #{tpu_custom_call.1} parent=0 // loop_exit
    _

</llo_original>
